<compile_context>
chip_gen: v5e
topology: v5e:2x2
jax: 0.10.0
libtpu: 0.0.40
codegen_flags: <defaults>
</compile_context>

<pallas_src>
import functools
import math

import jax
import jax.numpy as jnp
from jax import lax
from jax.experimental import pallas as pl
from jax.experimental.pallas import tpu as pltpu


def _gcnii_kernel(x_ref, a_ref, w0_ref, b0_ref, wc_ref, wout_ref, bout_ref,
                  out_ref, *, alpha, num_layers):
    # ---- h0 = relu(lin0(x))  (bf16 MXU operands, f32 accumulation) ----------
    h0 = jnp.dot(x_ref[...], w0_ref[...], preferred_element_type=jnp.float32)
    h0 = jnp.maximum(h0 + b0_ref[...], 0.0)

    a = a_ref[...]                      # (1 - alpha) * A_hat, bf16, loop-invariant
    h0a = alpha * h0                    # alpha * H0 identity term, f32, computed once

    # ---- 32 residual GCN-II layers; H carried in registers (4 vregs) --------
    def layer(l, h):
        # S = (1-alpha) A_hat @ H + alpha H0     (f32 accumulation)
        s = jnp.dot(a, h.astype(jnp.bfloat16),
                    preferred_element_type=jnp.float32) + h0a
        # out = S @ ((1-beta_l) I + beta_l W_l)  (beta folded into the weight)
        w = wc_ref[l]                   # dynamic index into stacked bf16 weights
        out = jnp.dot(s.astype(jnp.bfloat16), w,
                      preferred_element_type=jnp.float32)
        # relu; dropout(p=0.6) is identity at inference (self.training == False)
        return jnp.maximum(out, 0.0)

    h = lax.fori_loop(0, num_layers, layer, h0)

    # ---- logits = out(h); lane-dense [N, 128] store (classes padded) --------
    logits = jnp.dot(h.astype(jnp.bfloat16), wout_ref[...],
                     preferred_element_type=jnp.float32)
    out_ref[...] = logits + bout_ref[...]


def gcnii_forward(x, a_hat, params, *, alpha, betas):
    n, _ = x.shape
    hid = params["w0"].shape[1]
    layers = params["wc"].shape[0]
    ncls = params["wout"].shape[1]
    ncls_pad = ((ncls + 127) // 128) * 128

    # Fold beta into the conv weights: W'_l = (1 - beta_l) I + beta_l W_l.
    betas_arr = jnp.asarray(betas, jnp.float32)
    eye = jnp.eye(hid, dtype=jnp.float32)
    wc_fold = ((1.0 - betas_arr)[:, None, None] * eye[None, :, :]
               + betas_arr[:, None, None] * params["wc"]).astype(jnp.bfloat16)

    # Pre-scale A_hat by (1 - alpha); bf16 MXU operand.
    a_scaled = ((1.0 - float(alpha)) * a_hat).astype(jnp.bfloat16)

    # bf16 MXU operands for the dense layers; pad class dim to 128 lanes.
    x_bf = x.astype(jnp.bfloat16)
    w0_bf = params["w0"].astype(jnp.bfloat16)
    wout_pad = jnp.zeros((hid, ncls_pad), jnp.float32)
    wout_pad = wout_pad.at[:, :ncls].set(params["wout"]).astype(jnp.bfloat16)
    bout_pad = jnp.zeros((1, ncls_pad), jnp.float32).at[:, :ncls].set(
        params["bout"])

    kernel = functools.partial(_gcnii_kernel, alpha=float(alpha),
                               num_layers=layers)
    vmem = pl.BlockSpec(memory_space=pltpu.MemorySpace.VMEM)
    logits_pad = pl.pallas_call(
        kernel,
        out_shape=jax.ShapeDtypeStruct((n, ncls_pad), jnp.float32),
        in_specs=[vmem] * 7,
        out_specs=vmem,
        compiler_params=pltpu.CompilerParams(
            vmem_limit_bytes=32 * 1024 * 1024),
    )(x_bf, a_scaled, w0_bf, params["b0"], wc_fold, wout_pad, bout_pad)
    # TODO(synk): for large N / HID, tile A_hat and wc with a BlockSpec grid
    # (parallel row axis for v7x megacore, reduction axis last) instead of the
    # all-resident grid-less design used at these toy shapes.
    return logits_pad[:, :ncls]


# --------------------------- plain-JAX glue ----------------------------------
def dense_gcn_norm(edge_index, num_nodes):
    """Dense A_hat = D^{-1/2} (A + I) D^{-1/2} from a [2, E] edge_index."""
    src, dst = edge_index[0], edge_index[1]
    a = jnp.zeros((num_nodes, num_nodes), jnp.float32)
    a = a.at[dst, src].add(1.0)                      # message j -> i
    a = jnp.minimum(a, 1.0)                          # dedupe duplicate edges
    a = a * (1.0 - jnp.eye(num_nodes, dtype=jnp.float32))  # drop explicit self-loops
    a = a + jnp.eye(num_nodes, dtype=jnp.float32)    # add self loops once
    deg = a.sum(axis=1)
    dinv = jnp.where(deg > 0, 1.0 / jnp.sqrt(deg), 0.0)
    return dinv[:, None] * a * dinv[None, :]


def gcnii_reference(x, a_hat, params, *, alpha, betas):
    """Pure-JAX f32 reference of the same forward pass (for bf16 drift check)."""
    h0 = jnp.maximum(x @ params["w0"] + params["b0"], 0.0)
    h = h0
    for l in range(params["wc"].shape[0]):
        beta = betas[l]
        s = (1.0 - alpha) * (a_hat @ h) + alpha * h0
        out = (1.0 - beta) * s + beta * (s @ params["wc"][l])
        h = jnp.maximum(out, 0.0)
    return h @ params["wout"] + params["bout"]


def init_params(key, in_dim, hid, layers, num_classes):
    ks = jax.random.split(key, 5)
    # nn.Linear weights stored transposed: (in, out)
    w0 = jax.random.normal(ks[0], (in_dim, hid), jnp.float32) / math.sqrt(in_dim)
    b0 = jax.random.normal(ks[1], (1, hid), jnp.float32) * 0.01
    wc = jax.random.normal(ks[2], (layers, hid, hid), jnp.float32) / math.sqrt(hid)
    wout = jax.random.normal(ks[3], (hid, num_classes), jnp.float32) / math.sqrt(hid)
    bout = jax.random.normal(ks[4], (1, num_classes), jnp.float32) * 0.01
    return {"w0": w0, "b0": b0, "wc": wc, "wout": wout, "bout": bout}


if __name__ == "__main__":
    # small shapes consistent with the module defaults
    N, IN_DIM, HID, LAYERS, NUM_CLASSES = 64, 16, 64, 32, 7
    ALPHA, THETA = 0.1, 0.5
    BETAS = [math.log(THETA / (i + 1) + 1.0) for i in range(LAYERS)]

    key = jax.random.PRNGKey(0)
    k_x, k_e, k_p = jax.random.split(key, 3)

    x = jax.random.normal(k_x, (N, IN_DIM), jnp.float32)

    # deterministic undirected graph: ring edges + a few random chords
    ring_src = jnp.arange(N)
    ring_dst = (jnp.arange(N) + 1) % N
    extra = jax.random.randint(k_e, (2, 32), 0, N)
    src = jnp.concatenate([ring_src, ring_dst, extra[0], extra[1]])
    dst = jnp.concatenate([ring_dst, ring_src, extra[1], extra[0]])
    edge_index = jnp.stack([src, dst])               # [2, E]

    a_hat = dense_gcn_norm(edge_index, N)
    params = init_params(k_p, IN_DIM, HID, LAYERS, NUM_CLASSES)

    out = gcnii_forward(x, a_hat, params, alpha=ALPHA, betas=BETAS)
    out = jax.block_until_ready(out)

    assert out.shape == (N, NUM_CLASSES)
    assert bool(jnp.all(jnp.isfinite(out)))

    # bf16-operand drift check over 32 chained layers (f32 accumulation).
    ref = gcnii_reference(x, a_hat, params, alpha=ALPHA, betas=BETAS)
    rel = float(jnp.linalg.norm(out - ref) / (jnp.linalg.norm(ref) + 1e-6))
    assert rel < 0.1, f"bf16 drift too large vs f32 reference: rel={rel:.4f}"

    # TODO(synk): dropout(p=0.6) is only active in training mode; eval-mode
    # (identity) semantics are implemented here.
    print("KERNEL_OK")
</pallas_src>

<mosaic_0001>
module attributes {stable_mosaic.version = 11 : i64} {
  func.func @_gcnii_kernel(%arg0: memref<64x16xbf16, #tpu.memory_space<vmem>>, %arg1: memref<64x64xbf16, #tpu.memory_space<vmem>>, %arg2: memref<16x64xbf16, #tpu.memory_space<vmem>>, %arg3: memref<1x64xf32, #tpu.memory_space<vmem>>, %arg4: memref<32x64x64xbf16, #tpu.memory_space<vmem>>, %arg5: memref<64x128xbf16, #tpu.memory_space<vmem>>, %arg6: memref<1x128xf32, #tpu.memory_space<vmem>>, %arg7: memref<64x128xf32, #tpu.memory_space<vmem>>) attributes {dimension_semantics = [], scalar_prefetch = 0 : i64, scratch_operands = 0 : i64, tpu.core_type = #tpu.core_type<tc>} {
    %c0 = arith.constant 0 : index
    %c0_0 = arith.constant 0 : index
    %0 = vector.load %arg0[%c0, %c0_0] : memref<64x16xbf16, #tpu.memory_space<vmem>>, vector<64x16xbf16>
    %c0_1 = arith.constant 0 : index
    %c0_2 = arith.constant 0 : index
    %1 = vector.load %arg2[%c0_1, %c0_2] : memref<16x64xbf16, #tpu.memory_space<vmem>>, vector<16x64xbf16>
    %cst = arith.constant dense<0.000000e+00> : vector<64x64xf32>
    %2 = tpu.matmul %0, %1, %cst {dimension_numbers = #tpu.dot_dimension_numbers<[1], [0], [0], [1], [0, 0, 1, 1], [], []>} : vector<64x16xbf16>, vector<16x64xbf16>, vector<64x64xf32> -> vector<64x64xf32>
    %c0_3 = arith.constant 0 : index
    %c0_4 = arith.constant 0 : index
    %3 = vector.load %arg3[%c0_3, %c0_4] : memref<1x64xf32, #tpu.memory_space<vmem>>, vector<1x64xf32>
    %4 = vector.broadcast %3 : vector<1x64xf32> to vector<64x64xf32>
    %5 = arith.addf %2, %4 : vector<64x64xf32>
    %cst_5 = arith.constant 0.000000e+00 : f32
    %6 = vector.broadcast %cst_5 : f32 to vector<64x64xf32>
    %7 = arith.maximumf %5, %6 : vector<64x64xf32>
    %c0_6 = arith.constant 0 : index
    %c0_7 = arith.constant 0 : index
    %8 = vector.load %arg1[%c0_6, %c0_7] : memref<64x64xbf16, #tpu.memory_space<vmem>>, vector<64x64xbf16>
    %cst_8 = arith.constant 1.000000e-01 : f32
    %9 = vector.broadcast %cst_8 : f32 to vector<64x64xf32>
    %10 = arith.mulf %9, %7 : vector<64x64xf32>
    %c0_i32 = arith.constant 0 : i32
    %c32_i32 = arith.constant 32 : i32
    %11 = arith.addi %c0_i32, %c32_i32 : i32
    %c1_i32 = arith.constant 1 : i32
    %12 = scf.for %arg8 = %c0_i32 to %11 step %c1_i32 iter_args(%arg9 = %7) -> (vector<64x64xf32>)  : i32 {
      %20 = arith.truncf %arg9 : vector<64x64xf32> to vector<64x64xbf16>
      %cst_17 = arith.constant dense<0.000000e+00> : vector<64x64xf32>
      %21 = tpu.matmul %8, %20, %cst_17 {dimension_numbers = #tpu.dot_dimension_numbers<[1], [0], [0], [1], [0, 0, 1, 1], [], []>} : vector<64x64xbf16>, vector<64x64xbf16>, vector<64x64xf32> -> vector<64x64xf32>
      %22 = arith.addf %21, %10 : vector<64x64xf32>
      %23 = arith.index_cast %arg8 : i32 to index
      %c0_18 = arith.constant 0 : index
      %c0_19 = arith.constant 0 : index
      %24 = vector.load %arg4[%23, %c0_18, %c0_19] : memref<32x64x64xbf16, #tpu.memory_space<vmem>>, vector<1x64x64xbf16>
      %25 = vector.shape_cast %24 : vector<1x64x64xbf16> to vector<64x64xbf16>
      %26 = arith.truncf %22 : vector<64x64xf32> to vector<64x64xbf16>
      %cst_20 = arith.constant dense<0.000000e+00> : vector<64x64xf32>
      %27 = tpu.matmul %26, %25, %cst_20 {dimension_numbers = #tpu.dot_dimension_numbers<[1], [0], [0], [1], [0, 0, 1, 1], [], []>} : vector<64x64xbf16>, vector<64x64xbf16>, vector<64x64xf32> -> vector<64x64xf32>
      %cst_21 = arith.constant 0.000000e+00 : f32
      %28 = vector.broadcast %cst_21 : f32 to vector<64x64xf32>
      %29 = arith.maximumf %27, %28 : vector<64x64xf32>
      scf.yield %29 : vector<64x64xf32>
    }
    %c32_i32_9 = arith.constant 32 : i32
    %13 = arith.truncf %12 : vector<64x64xf32> to vector<64x64xbf16>
    %c0_10 = arith.constant 0 : index
    %c0_11 = arith.constant 0 : index
    %14 = vector.load %arg5[%c0_10, %c0_11] : memref<64x128xbf16, #tpu.memory_space<vmem>>, vector<64x128xbf16>
    %cst_12 = arith.constant dense<0.000000e+00> : vector<64x128xf32>
    %15 = tpu.matmul %13, %14, %cst_12 {dimension_numbers = #tpu.dot_dimension_numbers<[1], [0], [0], [1], [0, 0, 1, 1], [], []>} : vector<64x64xbf16>, vector<64x128xbf16>, vector<64x128xf32> -> vector<64x128xf32>
    %c0_13 = arith.constant 0 : index
    %c0_14 = arith.constant 0 : index
    %16 = vector.load %arg6[%c0_13, %c0_14] : memref<1x128xf32, #tpu.memory_space<vmem>>, vector<1x128xf32>
    %17 = vector.broadcast %16 : vector<1x128xf32> to vector<64x128xf32>
    %18 = arith.addf %15, %17 : vector<64x128xf32>
    %c0_15 = arith.constant 0 : index
    %c0_16 = arith.constant 0 : index
    %19 = vector.load %arg7[%c0_15, %c0_16] : memref<64x128xf32, #tpu.memory_space<vmem>>, vector<64x128xf32>
    tpu.vector_store %arg7[%c0_15, %c0_16], %18 {strides = array<i32>} : memref<64x128xf32, #tpu.memory_space<vmem>>, vector<64x128xf32>,
    return
  }
}

</mosaic_0001>

<llo_original>
// kernel: tpu_custom_call.1
$region0: #{tpu_custom_call.1}
  #allocation0 [shape = 'u32[]', space=smem, size = 0x4, offset = 0x4, fixed_abs, tag = 'smem constant byte address 0x4 - core index']
  #allocation1 [shape = 'u32[72,128]{1,0:T(1,128)}', space=vmem, size = 0x9000, scoped, tag = 'internal scratch']
  %s0 = inlined_call_operand.vmem [shape: bf16[64,16], index: 0, kind: input, shape index: {}]
  %s1 = inlined_call_operand.vmem [shape: bf16[64,64], index: 1, kind: input, shape index: {}]
  %s2 = inlined_call_operand.vmem [shape: bf16[16,64], index: 2, kind: input, shape index: {}]
  %s3 = inlined_call_operand.vmem [shape: f32[1,64], index: 3, kind: input, shape index: {}]
  %s4 = inlined_call_operand.hbm [shape: bf16[32,64,64], index: 4, kind: input, shape index: {}]
  %s5 = inlined_call_operand.hbm [shape: bf16[64,128], index: 5, kind: input, shape index: {}]
  %s6 = inlined_call_operand.vmem [shape: f32[1,128], index: 6, kind: input, shape index: {}]
  %s7 = inlined_call_operand.hbm [shape: f32[64,128], index: 7, kind: output, shape index: {}]
  %s8 = sld [smem:[#allocation0]]
  $region53: #{tpu_custom_call.1} parent=0
    _
  %s10 = ssub.s32 1, %s8
  %s11 = scalar_select 0, %s10, %s8
  $region1: #{tpu_custom_call.1} parent=0
    #allocation2 [shape = 'u8[524288]{0}', space=vmem, size = 0x80000, scoped, tag = 'input window, operand 4, single buffered']
    #allocation3 [shape = 's32[1]{0}', space=sflag, size = 0x4, scoped, tag = 'scoped memory for tpu_custom_call.1']
    #allocation4 [shape = 's32[1]{0}', space=sflag, size = 0x4, scoped, tag = 'scoped memory for tpu_custom_call.1']
    #allocation5 [shape = 'u8[16384]{0}', space=vmem, size = 0x4000, scoped, tag = 'input window, operand 5, single buffered']
    #allocation6 [shape = 's32[1]{0}', space=sflag, size = 0x4, scoped, tag = 'scoped memory for tpu_custom_call.1']
    #allocation7 [shape = 'u8[32768]{0}', space=vmem, size = 0x8000, scoped, tag = 'output window, operand 0, single buffered']
    %12 = vsyncpa [#allocation3], 0
    %13 = vsyncpa [#allocation6], 0
    %14 = vsyncpa [#allocation4], 0
    // Predicated region
    $region2: #{tpu_custom_call.1} parent=1 // pred_check
      _
    $region3: #{tpu_custom_call.1} parent=1 // pred_check_branch
      %16 = sbr.rel (0) target = $region5
    $region4: #{tpu_custom_call.1} parent=1 // pred_region
      _
    $region5: #{tpu_custom_call.1} parent=1 // pred_fallthru
      _
    // Predicated region
    $region6: #{tpu_custom_call.1} parent=1 // pred_check
      _
    $region7: #{tpu_custom_call.1} parent=1 // pred_check_branch
      %18 = sbr.rel (0) target = $region9
    $region8: #{tpu_custom_call.1} parent=1 // pred_region
      _
    $region9: #{tpu_custom_call.1} parent=1 // pred_fallthru
      _
    // Predicated region
    $region10: #{tpu_custom_call.1} parent=1 // pred_check
      _
    $region11: #{tpu_custom_call.1} parent=1 // pred_check_branch
      %20 = sbr.rel (0) target = $region13
    $region12: #{tpu_custom_call.1} parent=1 // pred_region
      _
    $region13: #{tpu_custom_call.1} parent=1 // pred_fallthru
      _
    // Predicated region
    $region14: #{tpu_custom_call.1} parent=1 // pred_check
      _
    $region15: #{tpu_custom_call.1} parent=1 // pred_check_branch
      %22 = sbr.rel (0) target = $region17
    $region16: #{tpu_custom_call.1} parent=1 // pred_region
      _
    $region17: #{tpu_custom_call.1} parent=1 // pred_fallthru
      _
    // Predicated region
    $region18: #{tpu_custom_call.1} parent=1 // pred_check
      _
    $region19: #{tpu_custom_call.1} parent=1 // pred_check_branch
      %24 = sbr.rel (0) target = $region21
    $region20: #{tpu_custom_call.1} parent=1 // pred_region
      %26 = vsyncadd [#allocation3], 0
      %s27 = sshll.u32 %s4, 4
      %s28 = int_to_ptr.hbm [resolvable:$true] %s27
      %s29 = sshll.u32 [#allocation2], 4
      %s30 = int_to_ptr.vmem [resolvable:$true] %s29
      %35 = dma.hbm_to_vmem [thread:$0]  %s28, 16384, %s30, [#allocation3], 64, 64, 4
    $region21: #{tpu_custom_call.1} parent=1 // pred_fallthru
      _
    // Predicated region
    $region22: #{tpu_custom_call.1} parent=1 // pred_check
      _
    $region23: #{tpu_custom_call.1} parent=1 // pred_check_branch
      %37 = sbr.rel (0) target = $region25
    $region24: #{tpu_custom_call.1} parent=1 // pred_region
      %39 = vsyncadd [#allocation6], 0
      %s40 = sshll.u32 %s5, 4
      %s41 = int_to_ptr.hbm [resolvable:$true] %s40
      %s42 = sshll.u32 [#allocation5], 4
      %s43 = int_to_ptr.vmem [resolvable:$true] %s42
      %48 = dma.hbm_to_vmem [thread:$0]  %s41, 512, %s43, [#allocation6], 64, 64, 4
    $region25: #{tpu_custom_call.1} parent=1 // pred_fallthru
      _
    // Predicated region
    $region26: #{tpu_custom_call.1} parent=1 // pred_check
      _
    $region27: #{tpu_custom_call.1} parent=1 // pred_check_branch
      %50 = sbr.rel (0) target = $region29
    $region28: #{tpu_custom_call.1} parent=1 // pred_region
      _
    $region29: #{tpu_custom_call.1} parent=1 // pred_fallthru
      _
    // Predicated region
    $region30: #{tpu_custom_call.1} parent=1 // pred_check
      _
    $region31: #{tpu_custom_call.1} parent=1 // pred_check_branch
      %52 = sbr.rel (0) target = $region33
    $region32: #{tpu_custom_call.1} parent=1 // pred_region
      %54 = dma.done [#allocation3], 16384
    $region33: #{tpu_custom_call.1} parent=1 // pred_fallthru
      _
    // Predicated region
    $region34: #{tpu_custom_call.1} parent=1 // pred_check
      _
    $region35: #{tpu_custom_call.1} parent=1 // pred_check_branch
      %56 = sbr.rel (0) target = $region37
    $region36: #{tpu_custom_call.1} parent=1 // pred_region
      %58 = dma.done [#allocation6], 512
    $region37: #{tpu_custom_call.1} parent=1 // pred_fallthru
      _
    %v60 = vld [vmem:[%s0] sm:$0xf]
    %v61 = vld [vmem:[%s0 + $0x4] sm:$0xf]
    %v62 = vld [vmem:[%s0 + $0x8] sm:$0xf]
    %v63 = vld [vmem:[%s0 + $0xc] sm:$0xf]
    %v64 = vld [vmem:[%s0 + $0x10] sm:$0xf]
    %v65 = vld [vmem:[%s0 + $0x14] sm:$0xf]
    %v66 = vld [vmem:[%s0 + $0x18] sm:$0xf]
    %v67 = vld [vmem:[%s0 + $0x1c] sm:$0xf]
    %v68 = vld [vmem:[%s2] sm:$0xf]
    %v69 = vld [vmem:[%s2 + $0x4] sm:$0xf]
    %v70 = vld [vmem:[%s3] sm:$0x1]
    %v72 = vperm.slane %v70, 0
    %v82 = vunpack.c.l.b16 %v60
    %v83 = vunpack.c.l.b16 %v61
    %v84 = vunpack.c.l.b16 %v62
    %v85 = vunpack.c.l.b16 %v63
    %v86 = vunpack.c.l.b16 %v64
    %v87 = vunpack.c.l.b16 %v65
    %v88 = vunpack.c.l.b16 %v66
    %v89 = vunpack.c.l.b16 %v67
    %v90 = vpack.c.b16 %v83, %v82
    %v91 = vpack.c.b16 %v85, %v84
    %v92 = vpack.c.b16 %v87, %v86
    %v93 = vpack.c.b16 %v89, %v88
    %v96 = vunpack.c.l.b16 %v68
    %v97 = vunpack.c.l.b16 %v69
    %v98 = vpack.c.b16 %v97, %v96
    %vm100 = vcmask 130048
    %v102 = vsel %vm100, %v90, 0
    %v105 = vsel %vm100, %v91, 0
    %v108 = vsel %vm100, %v92, 0
    %v111 = vsel %vm100, %v93, 0
    %113 = vmatpush.bf16.msra.mxu0 0
    %114 = vmatpush.bf16.msra.mxu0 0
    %115 = vmatpush.bf16.msra.mxu0 0
    %116 = vmatpush.bf16.msra.mxu0 0
    %117 = vmatpush.bf16.msra.mxu0 0
    %118 = vmatpush.bf16.msra.mxu0 0
    %119 = vmatpush.bf16.msra.mxu0 0
    %120 = vmatpush.bf16.msra.mxu0 %v98
    %121 = vmatmul.bf16.gmra.mxu0 %v102
    %v122 = vpop.f32.mrf.mxu0
    %v123 = vadd.f32 %v72, %v122
    %v124 = vpop.f32.mrf.mxu0
    %v125 = vadd.f32 %v72, %v124
    %126 = vmatmul.bf16.gmra.mxu0 %v105
    %v127 = vpop.f32.mrf.mxu0
    %v128 = vadd.f32 %v72, %v127
    %v129 = vpop.f32.mrf.mxu0
    %v130 = vadd.f32 %v72, %v129
    %131 = vmatmul.bf16.gmra.mxu0 %v108
    %v132 = vpop.f32.mrf.mxu0
    %v133 = vadd.f32 %v72, %v132
    %v134 = vpop.f32.mrf.mxu0
    %v135 = vadd.f32 %v72, %v134
    %136 = vmatmul.bf16.gmra.mxu0 %v111
    %v137 = vpop.f32.mrf.mxu0
    %v138 = vadd.f32 %v72, %v137
    %v139 = vpop.f32.mrf.mxu0
    %v140 = vadd.f32 %v72, %v139
    %141 = vdwg.mxu0
    %v142 = vmax.f32 %v123, 0.0
    %v143 = vmax.f32 %v125, 0.0
    %v144 = vmax.f32 %v128, 0.0
    %v145 = vmax.f32 %v130, 0.0
    %v146 = vmax.f32 %v133, 0.0
    %v147 = vmax.f32 %v135, 0.0
    %v148 = vmax.f32 %v138, 0.0
    %v149 = vmax.f32 %v140, 0.0
    %v150 = vld [vmem:[%s1] sm:$0xf]
    %v151 = vld [vmem:[%s1 + $0x4] sm:$0xf]
    %v152 = vld [vmem:[%s1 + $0x8] sm:$0xf]
    %v153 = vld [vmem:[%s1 + $0xc] sm:$0xf]
    %v154 = vld [vmem:[%s1 + $0x10] sm:$0xf]
    %v155 = vld [vmem:[%s1 + $0x14] sm:$0xf]
    %v156 = vld [vmem:[%s1 + $0x18] sm:$0xf]
    %v157 = vld [vmem:[%s1 + $0x1c] sm:$0xf]
    %v158 = vmul.f32 %v142, 0.1
    %v159 = vmul.f32 %v143, 0.1
    %v160 = vmul.f32 %v144, 0.1
    %v161 = vmul.f32 %v145, 0.1
    %v162 = vmul.f32 %v146, 0.1
    %v163 = vmul.f32 %v147, 0.1
    %v164 = vmul.f32 %v148, 0.1
    %v165 = vmul.f32 %v149, 0.1
    loop: start=0, step=1, limit=32
    $region38: #{tpu_custom_call.1} parent=1 // loop_pre_header
      _
    $region39: #{tpu_custom_call.1} parent=1 // loop_header
      %s167 = sphi 0, %s171
      %p168 = scmp.ge.s32.totalorder %s167, 32
      %v172 = vphi %v142, %v326
      %v173 = vphi %v143, %v327
      %v174 = vphi %v144, %v328
      %v175 = vphi %v145, %v329
      %v176 = vphi %v146, %v330
      %v177 = vphi %v147, %v331
      %v178 = vphi %v148, %v332
      %v179 = vphi %v149, %v333
    $region40: #{tpu_custom_call.1} parent=1 // loop_header_branch
      %170 = sbr.rel (%p168) target = $region44
    $region41: #{tpu_custom_call.1} parent=1 // loop_body
      %v180 = vpack.c.bf16 %v173, %v172
      %v181 = vpack.c.bf16 %v175, %v174
      %v182 = vpack.c.bf16 %v177, %v176
      %v183 = vpack.c.bf16 %v179, %v178
      %v192 = vunpack.c.l.b16 %v150
      %v193 = vunpack.c.l.b16 %v151
      %v194 = vunpack.c.l.b16 %v152
      %v195 = vunpack.c.l.b16 %v153
      %v196 = vunpack.c.l.b16 %v154
      %v197 = vunpack.c.l.b16 %v155
      %v198 = vunpack.c.l.b16 %v156
      %v199 = vunpack.c.l.b16 %v157
      %v200 = vpack.c.b16 %v193, %v192
      %v201 = vpack.c.b16 %v195, %v194
      %v202 = vpack.c.b16 %v197, %v196
      %v203 = vpack.c.b16 %v199, %v198
      %vm204 = vcmask 523264
      %v206 = vsel %vm204, %v200, 0
      %v209 = vsel %vm204, %v201, 0
      %v212 = vsel %vm204, %v202, 0
      %v215 = vsel %vm204, %v203, 0
      %217 = vmatpush.bf16.msra.mxu0 0
      %218 = vmatpush.bf16.msra.mxu0 0
      %219 = vmatpush.bf16.msra.mxu0 0
      %220 = vmatpush.bf16.msra.mxu0 0
      %221 = vmatpush.bf16.msra.mxu0 %v183
      %222 = vmatpush.bf16.msra.mxu0 %v182
      %223 = vmatpush.bf16.msra.mxu0 %v181
      %224 = vmatpush.bf16.msra.mxu0 %v180
      %225 = vmatmul.bf16.gmra.mxu0 %v206
      %v226 = vpop.f32.mrf.mxu0
      %v227 = vadd.f32 %v158, %v226
      %v228 = vpop.f32.mrf.mxu0
      %v229 = vadd.f32 %v159, %v228
      %230 = vmatmul.bf16.gmra.mxu0 %v209
      %v231 = vpop.f32.mrf.mxu0
      %v232 = vadd.f32 %v160, %v231
      %v233 = vpop.f32.mrf.mxu0
      %v234 = vadd.f32 %v161, %v233
      %235 = vmatmul.bf16.gmra.mxu0 %v212
      %v236 = vpop.f32.mrf.mxu0
      %v237 = vadd.f32 %v162, %v236
      %v238 = vpop.f32.mrf.mxu0
      %v239 = vadd.f32 %v163, %v238
      %240 = vmatmul.bf16.gmra.mxu0 %v215
      %v241 = vpop.f32.mrf.mxu0
      %v242 = vadd.f32 %v164, %v241
      %v243 = vpop.f32.mrf.mxu0
      %v244 = vadd.f32 %v165, %v243
      %245 = vdwg.mxu0
      %s246 = smul.u32 %s167, 8
      %s247 = smul.addr %s246, 4
      %s248 = scalar_lea.vmem [#allocation2], %s247
      %v249 = vld [vmem:[%s248] sm:$0xf]
      %v250 = vld [vmem:[%s248 + $0x4] sm:$0xf]
      %v251 = vld [vmem:[%s248 + $0x8] sm:$0xf]
      %v252 = vld [vmem:[%s248 + $0xc] sm:$0xf]
      %v253 = vld [vmem:[%s248 + $0x10] sm:$0xf]
      %v254 = vld [vmem:[%s248 + $0x14] sm:$0xf]
      %v255 = vld [vmem:[%s248 + $0x18] sm:$0xf]
      %v256 = vld [vmem:[%s248 + $0x1c] sm:$0xf]
      %v257 = vpack.c.bf16 %v229, %v227
      %v258 = vpack.c.bf16 %v234, %v232
      %v259 = vpack.c.bf16 %v239, %v237
      %v260 = vpack.c.bf16 %v244, %v242
      %v269 = vunpack.c.l.b16 %v249
      %v270 = vunpack.c.l.b16 %v250
      %v271 = vunpack.c.l.b16 %v251
      %v272 = vunpack.c.l.b16 %v252
      %v273 = vunpack.c.l.b16 %v253
      %v274 = vunpack.c.l.b16 %v254
      %v275 = vunpack.c.l.b16 %v255
      %v276 = vunpack.c.l.b16 %v256
      %v277 = vpack.c.b16 %v270, %v269
      %v278 = vpack.c.b16 %v272, %v271
      %v279 = vpack.c.b16 %v274, %v273
      %v280 = vpack.c.b16 %v276, %v275
      %v286 = vsel %vm204, %v257, 0
      %v289 = vsel %vm204, %v258, 0
      %v292 = vsel %vm204, %v259, 0
      %v295 = vsel %vm204, %v260, 0
      %297 = vmatpush.bf16.msra.mxu0 0
      %298 = vmatpush.bf16.msra.mxu0 0
      %299 = vmatpush.bf16.msra.mxu0 0
      %300 = vmatpush.bf16.msra.mxu0 0
      %301 = vmatpush.bf16.msra.mxu0 %v280
      %302 = vmatpush.bf16.msra.mxu0 %v279
      %303 = vmatpush.bf16.msra.mxu0 %v278
      %304 = vmatpush.bf16.msra.mxu0 %v277
      %305 = vmatmul.bf16.gmra.mxu0 %v286
      %v306 = vpop.f32.mrf.mxu0
      %v307 = vadd.f32 0.0, %v306
      %v308 = vpop.f32.mrf.mxu0
      %v309 = vadd.f32 0.0, %v308
      %310 = vmatmul.bf16.gmra.mxu0 %v289
      %v311 = vpop.f32.mrf.mxu0
      %v312 = vadd.f32 0.0, %v311
      %v313 = vpop.f32.mrf.mxu0
      %v314 = vadd.f32 0.0, %v313
      %315 = vmatmul.bf16.gmra.mxu0 %v292
      %v316 = vpop.f32.mrf.mxu0
      %v317 = vadd.f32 0.0, %v316
      %v318 = vpop.f32.mrf.mxu0
      %v319 = vadd.f32 0.0, %v318
      %320 = vmatmul.bf16.gmra.mxu0 %v295
      %v321 = vpop.f32.mrf.mxu0
      %v322 = vadd.f32 0.0, %v321
      %v323 = vpop.f32.mrf.mxu0
      %v324 = vadd.f32 0.0, %v323
      %325 = vdwg.mxu0
      %v326 = vmax.f32 %v307, 0.0
      %v327 = vmax.f32 %v309, 0.0
      %v328 = vmax.f32 %v312, 0.0
      %v329 = vmax.f32 %v314, 0.0
      %v330 = vmax.f32 %v317, 0.0
      %v331 = vmax.f32 %v319, 0.0
      %v332 = vmax.f32 %v322, 0.0
      %v333 = vmax.f32 %v324, 0.0
    $region42: #{tpu_custom_call.1} parent=1 // loop_footer
      %s171 = sadd.s32 1, %s167
    $region43: #{tpu_custom_call.1} parent=1 // loop_footer_branch
      %166 = sbr.rel target = $region39
    $region44: #{tpu_custom_call.1} parent=1 // loop_exit
      _
    %v334 = vpack.c.bf16 %v173, %v172
    %v335 = vpack.c.bf16 %v175, %v174
    %v336 = vpack.c.bf16 %v177, %v176
    %v337 = vpack.c.bf16 %v179, %v178
    %v338 = vld [vmem:[#allocation5] sm:$0xf]
    %v339 = vld [vmem:[#allocation5 + $0x4] sm:$0xf]
    %v340 = vld [vmem:[#allocation5 + $0x8] sm:$0xf]
    %v341 = vld [vmem:[#allocation5 + $0xc] sm:$0xf]
    %v342 = vld [vmem:[#allocation5 + $0x10] sm:$0xf]
    %v343 = vld [vmem:[#allocation5 + $0x14] sm:$0xf]
    %v344 = vld [vmem:[#allocation5 + $0x18] sm:$0xf]
    %v345 = vld [vmem:[#allocation5 + $0x1c] sm:$0xf]
    %v346 = vld [vmem:[%s6] sm:$0x1]
    %v348 = vperm.slane %v346, 0
    %v358 = vunpack.c.l.b16 %v338
    %v359 = vunpack.c.l.b16 %v339
    %v360 = vunpack.c.l.b16 %v340
    %v361 = vunpack.c.l.b16 %v341
    %v362 = vunpack.c.l.b16 %v342
    %v363 = vunpack.c.l.b16 %v343
    %v364 = vunpack.c.l.b16 %v344
    %v365 = vunpack.c.l.b16 %v345
    %v366 = vpack.c.b16 %v359, %v358
    %v367 = vpack.c.b16 %v361, %v360
    %v368 = vpack.c.b16 %v363, %v362
    %v369 = vpack.c.b16 %v365, %v364
    %vm374 = vcmask 523264
    %v376 = vsel %vm374, %v334, 0
    %v379 = vsel %vm374, %v335, 0
    %v382 = vsel %vm374, %v336, 0
    %v385 = vsel %vm374, %v337, 0
    %387 = vmatpush.bf16.msra.mxu0 0
    %388 = vmatpush.bf16.msra.mxu0 0
    %389 = vmatpush.bf16.msra.mxu0 0
    %390 = vmatpush.bf16.msra.mxu0 0
    %391 = vmatpush.bf16.msra.mxu0 %v369
    %392 = vmatpush.bf16.msra.mxu0 %v368
    %393 = vmatpush.bf16.msra.mxu0 %v367
    %394 = vmatpush.bf16.msra.mxu0 %v366
    %395 = vmatmul.bf16.gmra.mxu0 %v376
    %v396 = vpop.f32.mrf.mxu0
    %v397 = vadd.f32 %v348, %v396
    %v398 = vpop.f32.mrf.mxu0
    %v399 = vadd.f32 %v348, %v398
    %400 = vmatmul.bf16.gmra.mxu0 %v379
    %v401 = vpop.f32.mrf.mxu0
    %v402 = vadd.f32 %v348, %v401
    %v403 = vpop.f32.mrf.mxu0
    %v404 = vadd.f32 %v348, %v403
    %405 = vmatmul.bf16.gmra.mxu0 %v382
    %v406 = vpop.f32.mrf.mxu0
    %v407 = vadd.f32 %v348, %v406
    %v408 = vpop.f32.mrf.mxu0
    %v409 = vadd.f32 %v348, %v408
    %410 = vmatmul.bf16.gmra.mxu0 %v385
    %v411 = vpop.f32.mrf.mxu0
    %v412 = vadd.f32 %v348, %v411
    %v413 = vpop.f32.mrf.mxu0
    %v414 = vadd.f32 %v348, %v413
    %415 = vdwg.mxu0
    %416 = vst [vmem:[#allocation7] sm:$0xff] %v397
    %417 = vst [vmem:[#allocation7 + $0x8] sm:$0xff] %v399
    %418 = vst [vmem:[#allocation7 + $0x10] sm:$0xff] %v402
    %419 = vst [vmem:[#allocation7 + $0x18] sm:$0xff] %v404
    %420 = vst [vmem:[#allocation7 + $0x20] sm:$0xff] %v407
    %421 = vst [vmem:[#allocation7 + $0x28] sm:$0xff] %v409
    %422 = vst [vmem:[#allocation7 + $0x30] sm:$0xff] %v412
    %423 = vst [vmem:[#allocation7 + $0x38] sm:$0xff] %v414
    // Predicated region
    $region45: #{tpu_custom_call.1} parent=1 // pred_check
      _
    $region46: #{tpu_custom_call.1} parent=1 // pred_check_branch
      %425 = sbr.rel (0) target = $region48
    $region47: #{tpu_custom_call.1} parent=1 // pred_region
      %427 = vsyncadd [#allocation4], 0
      %s428 = sshll.u32 [#allocation7], 4
      %s429 = int_to_ptr.vmem [resolvable:$true] %s428
      %s430 = sshll.u32 %s7, 4
      %s431 = int_to_ptr.hbm [resolvable:$true] %s430
      %436 = dma.vmem_to_hbm [thread:$0]  %s429, 1024, %s431, [#allocation4], 128, 128, 8
    $region48: #{tpu_custom_call.1} parent=1 // pred_fallthru
      _
    // Predicated region
    $region49: #{tpu_custom_call.1} parent=1 // pred_check
      _
    $region50: #{tpu_custom_call.1} parent=1 // pred_check_branch
      %438 = sbr.rel (0) target = $region52
    $region51: #{tpu_custom_call.1} parent=1 // pred_region
      %440 = dma.done [#allocation4], 1024
    $region52: #{tpu_custom_call.1} parent=1 // pred_fallthru
      _
    %441 = vsyncpa [#allocation3], 1
    %442 = vsyncpa [#allocation6], 1
    %443 = vsyncpa [#allocation4], 1

</llo_original>
